<compile_context>
chip_gen: v5e
topology: v5e:2x2
jax: 0.10.0
libtpu: 0.0.40
codegen_flags: <defaults>
</compile_context>

<pallas_src>
import jax
import jax.numpy as jnp
import numpy as np
from jax.experimental import pallas as pl
from jax.experimental.pallas import tpu as pltpu


def _dropout_tied_kernel(x_ref, m_ref, o_ref):
    # Mask already holds 0 or 1/(1-p) in x's dtype -> single multiply, no casts.
    o_ref[...] = x_ref[...] * m_ref[...]


def _round_up(n, m):
    return ((n + m - 1) // m) * m


def _round_down_ge(n, m):
    return max((n // m) * m, m)


_BLOCK_BYTES = 4 << 20   # ~4 MiB per block buffer (~16 MiB double-buffered in+out)
_VMEM_LIMIT = 48 << 20   # > v5e 16 MiB default scoped VMEM, < v7x 64 MiB physical


def _cf_block_sizes(R, L, itemsize):
    """Block sizes for the (R, L) channels-first view, sized by byte budget."""
    row_gran = max(8, 32 // max(itemsize, 1))          # sublane packing per dtype
    budget = _BLOCK_BYTES // max(itemsize, 1)          # elements per block buffer
    # Lane axis first: lane-dense output blocks are the big lever.
    if L <= 128:
        block_l = L                                    # == full dim (allowed)
    else:
        block_l = min(_round_up(L, 128), 2048)
    block_r = min(_round_up(R, row_gran),
                  _round_down_ge(budget // max(block_l, 1), row_gran),
                  16384)
    # Small-R shapes: spend the leftover budget on wider lane blocks instead of
    # degenerating into many tiny grid steps.
    if block_r >= _round_up(R, row_gran) and L > block_l:
        block_r = _round_up(R, row_gran)
        block_l = min(_round_up(L, 128),
                      _round_down_ge(budget // max(block_r, 1), 128),
                      32768)
    return block_r, block_l


def _cl_block_len(L, C, itemsize):
    """Sequence-block length for the (B, L, C) channels-last view."""
    row_gran = max(8, 32 // max(itemsize, 1))
    budget = _BLOCK_BYTES // max(itemsize, 1)
    block_l = _round_down_ge(budget // max(C, 1), row_gran)
    return min(block_l, _round_up(L, row_gran), 16384)


def dropout_nd(x, key, *, p=0.5, tie=True, transposed=True, training=True,
               donate=False):
    """JAX/Pallas equivalent of DropoutNd.forward.

    x: (batch, dim, lengths...) if transposed=True, else (batch, lengths..., dim).
    key: jax.random PRNG key (plays the role of torch's global RNG state).
    donate: if the caller can donate x, alias the output onto x's HBM buffer.
    """
    if not (0.0 <= p < 1.0):
        raise ValueError(f"dropout probability has to be in [0, 1), but got {p}")
    if not training or p == 0.0:
        return x
    if not tie:
        # TODO(synk): untied (per-element) mask variant not implemented; module
        # default is tie=True, which is what this kernel reproduces.
        raise NotImplementedError("tie=False not implemented")

    itemsize = jnp.dtype(x.dtype).itemsize
    scale = 1.0 / (1.0 - p)
    io_alias = {0: 0} if donate else {}
    params = pltpu.CompilerParams(
        dimension_semantics=("parallel", "parallel"),
        vmem_limit_bytes=_VMEM_LIMIT,
    )

    if transposed:
        # Channels-first: flatten to (R, L) rows = (batch, channel), lanes = space.
        B, C = x.shape[0], x.shape[1]
        L = max(int(np.prod(x.shape[2:])), 1)
        R = B * C
        x2 = x.reshape(R, L)

        # Tied mask: one uniform per (batch, channel) row; scale folded in and
        # pre-cast to x's dtype (note: 1/(1-p) rounds to bf16 for bf16 inputs).
        u = jax.random.uniform(key, (R, 1), dtype=jnp.float32)
        mask = jnp.where(u < (1.0 - p), scale, 0.0).astype(x.dtype)

        block_r, block_l = _cf_block_sizes(R, L, itemsize)
        grid = (pl.cdiv(R, block_r), pl.cdiv(L, block_l))

        out = pl.pallas_call(
            _dropout_tied_kernel,
            out_shape=jax.ShapeDtypeStruct((R, L), x.dtype),
            grid=grid,
            in_specs=[
                pl.BlockSpec((block_r, block_l), lambda i, j: (i, j)),
                pl.BlockSpec((block_r, 1), lambda i, j: (i, 0)),
            ],
            out_specs=pl.BlockSpec((block_r, block_l), lambda i, j: (i, j)),
            input_output_aliases=io_alias,
            compiler_params=params,
        )(x2, mask)
        return out.reshape(x.shape)

    # Channels-last: native path — no moveaxis transposes around the kernel.
    B, C = x.shape[0], x.shape[-1]
    L = max(int(np.prod(x.shape[1:-1])), 1)
    x3 = x.reshape(B, L, C)

    u = jax.random.uniform(key, (B, 1, C), dtype=jnp.float32)
    mask = jnp.where(u < (1.0 - p), scale, 0.0).astype(x.dtype)

    block_l = _cl_block_len(L, C, itemsize)
    grid = (B, pl.cdiv(L, block_l))

    out = pl.pallas_call(
        _dropout_tied_kernel,
        out_shape=jax.ShapeDtypeStruct((B, L, C), x.dtype),
        grid=grid,
        in_specs=[
            pl.BlockSpec((1, block_l, C), lambda b, l: (b, l, 0)),
            pl.BlockSpec((1, 1, C), lambda b, l: (b, 0, 0)),
        ],
        out_specs=pl.BlockSpec((1, block_l, C), lambda b, l: (b, l, 0)),
        input_output_aliases=io_alias,
        compiler_params=params,
    )(x3, mask)
    return out.reshape(x.shape)


if __name__ == "__main__":
    key = jax.random.PRNGKey(0)
    xkey, mkey, xkey2, mkey2 = jax.random.split(key, 4)

    # Channels-first (transposed=True, module default): (batch, dim, H, W).
    B, C, H, W = 2, 4, 16, 16
    p = 0.5
    x = jax.random.normal(xkey, (B, C, H, W), dtype=jnp.float32)
    y = jax.block_until_ready(
        dropout_nd(x, mkey, p=p, tie=True, transposed=True, training=True))
    assert y.shape == x.shape

    # DropoutNd semantics: each (b, c) slice is either all zero (dropped) or
    # equal to x * 1/(1-p) (kept) — mask tied across spatial dims.
    scale = 1.0 / (1.0 - p)
    xf = np.asarray(x).reshape(B * C, H * W)
    yf = np.asarray(y).reshape(B * C, H * W)
    for r in range(B * C):
        dropped = bool(np.all(yf[r] == 0.0))
        kept = bool(np.allclose(yf[r], xf[r] * scale, atol=1e-5))
        assert dropped or kept, f"row {r} violates tied-dropout semantics"

    # Channels-last (transposed=False): (batch, seq, dim) — native path.
    Bc, S, D = 2, 8, 32
    pc = 0.25
    xc = jax.random.normal(xkey2, (Bc, S, D), dtype=jnp.float32)
    yc = jax.block_until_ready(
        dropout_nd(xc, mkey2, p=pc, tie=True, transposed=False, training=True))
    assert yc.shape == xc.shape
    sc = 1.0 / (1.0 - pc)
    xcn, ycn = np.asarray(xc), np.asarray(yc)
    for b in range(Bc):
        for d in range(D):
            dropped = bool(np.all(ycn[b, :, d] == 0.0))
            kept = bool(np.allclose(ycn[b, :, d], xcn[b, :, d] * sc, atol=1e-5))
            assert dropped or kept, f"(b={b}, d={d}) violates tied-dropout semantics"

    # Eval / p == 0 paths are identity.
    assert bool(jnp.array_equal(dropout_nd(x, mkey, p=p, training=False), x))
    assert bool(jnp.array_equal(dropout_nd(x, mkey, p=0.0, training=True), x))

    print("KERNEL_OK")
</pallas_src>

<mosaic_0001>
module attributes {stable_mosaic.version = 11 : i64} {
  func.func @_dropout_tied_kernel(%arg0: i32, %arg1: i32, %arg2: memref<8x256xf32, #tpu.memory_space<vmem>>, %arg3: memref<8x1xf32, #tpu.memory_space<vmem>>, %arg4: memref<8x256xf32, #tpu.memory_space<vmem>>) attributes {dimension_semantics = [#tpu.dimension_semantics<parallel>, #tpu.dimension_semantics<parallel>], iteration_bounds = array<i64: 1, 1>, scalar_prefetch = 0 : i64, scratch_operands = 0 : i64, tpu.core_type = #tpu.core_type<tc>, window_params = [{transform_indices = @transform_0, window_bounds = array<i64: 8, 256>}, {transform_indices = @transform_1, window_bounds = array<i64: 8, 1>}, {transform_indices = @transform_2, window_bounds = array<i64: 8, 256>}]} {
    %c0 = arith.constant 0 : index
    %c0_0 = arith.constant 0 : index
    %0 = vector.load %arg2[%c0, %c0_0] : memref<8x256xf32, #tpu.memory_space<vmem>>, vector<8x256xf32>
    %c0_1 = arith.constant 0 : index
    %c0_2 = arith.constant 0 : index
    %1 = vector.load %arg3[%c0_1, %c0_2] : memref<8x1xf32, #tpu.memory_space<vmem>>, vector<8x1xf32>
    %2 = vector.broadcast %1 : vector<8x1xf32> to vector<8x256xf32>
    %3 = arith.mulf %0, %2 : vector<8x256xf32>
    %c0_3 = arith.constant 0 : index
    %c0_4 = arith.constant 0 : index
    %4 = vector.load %arg4[%c0_3, %c0_4] : memref<8x256xf32, #tpu.memory_space<vmem>>, vector<8x256xf32>
    tpu.vector_store %arg4[%c0_3, %c0_4], %3 {strides = array<i32>} : memref<8x256xf32, #tpu.memory_space<vmem>>, vector<8x256xf32>,
    return
  }
  func.func @transform_0(%arg0: i32, %arg1: i32) -> (i32, i32) {
    %c0_i32 = arith.constant 0 : i32
    return %arg0, %arg1 : i32, i32
  }
  func.func @transform_1(%arg0: i32, %arg1: i32) -> (i32, i32) {
    %c0_i32 = arith.constant 0 : i32
    %c0_i32_0 = arith.constant 0 : i32
    return %arg0, %c0_i32 : i32, i32
  }
  func.func @transform_2(%arg0: i32, %arg1: i32) -> (i32, i32) {
    %c0_i32 = arith.constant 0 : i32
    return %arg0, %arg1 : i32, i32
  }
}

</mosaic_0001>

<llo_original>
// kernel: tpu_custom_call.1
$region0: #{tpu_custom_call.1}
  #allocation0 [shape = 'u32[]', space=smem, size = 0x4, offset = 0x4, fixed_abs, tag = 'smem constant byte address 0x4 - core index']
  #allocation1 [shape = 'u32[72,128]{1,0:T(1,128)}', space=vmem, size = 0x9000, scoped, tag = 'internal scratch']
  %s0 = inlined_call_operand.hbm [shape: f32[8,256], index: 0, kind: input, shape index: {}]
  %s1 = inlined_call_operand.vmem [shape: f32[8,1], index: 1, kind: input, shape index: {}]
  %s2 = inlined_call_operand.hbm [shape: f32[8,256], index: 2, kind: output, shape index: {}]
  %s3 = sld [smem:[#allocation0]]
  $region22: #{tpu_custom_call.1} parent=0
    _
  %s5 = ssub.s32 1, %s3
  %s6 = scalar_select 0, %s5, %s3
  $region1: #{tpu_custom_call.1} parent=0
    #allocation2 [shape = 'u8[8192]{0}', space=vmem, size = 0x2000, scoped, tag = 'input window, operand 0, single buffered']
    #allocation3 [shape = 's32[1]{0}', space=sflag, size = 0x4, scoped, tag = 'scoped memory for tpu_custom_call.1']
    #allocation4 [shape = 's32[1]{0}', space=sflag, size = 0x4, scoped, tag = 'scoped memory for tpu_custom_call.1']
    #allocation5 [shape = 'u8[8192]{0}', space=vmem, size = 0x2000, scoped, tag = 'output window, operand 0, single buffered']
    %7 = vsyncpa [#allocation3], 0
    %8 = vsyncpa [#allocation4], 0
    // Predicated region
    $region2: #{tpu_custom_call.1} parent=1 // pred_check
      _
    $region3: #{tpu_custom_call.1} parent=1 // pred_check_branch
      %10 = sbr.rel (0) target = $region5
    $region4: #{tpu_custom_call.1} parent=1 // pred_region
      %12 = vsyncadd [#allocation3], 0
      %s14 = sshll.u32 %s0, 4
      %s15 = int_to_ptr.hbm [resolvable:$true] %s14
      %s16 = sshll.u32 [#allocation2], 4
      %s17 = int_to_ptr.vmem [resolvable:$true] %s16
      %19 = dma.hbm_to_vmem [thread:$0]  %s15, 256, %s17, [#allocation3]
    $region5: #{tpu_custom_call.1} parent=1 // pred_fallthru
      _
    // Predicated region
    $region6: #{tpu_custom_call.1} parent=1 // pred_check
      _
    $region7: #{tpu_custom_call.1} parent=1 // pred_check_branch
      %21 = sbr.rel (0) target = $region9
    $region8: #{tpu_custom_call.1} parent=1 // pred_region
      _
    $region9: #{tpu_custom_call.1} parent=1 // pred_fallthru
      _
    // Predicated region
    $region10: #{tpu_custom_call.1} parent=1 // pred_check
      _
    $region11: #{tpu_custom_call.1} parent=1 // pred_check_branch
      %23 = sbr.rel (0) target = $region13
    $region12: #{tpu_custom_call.1} parent=1 // pred_region
      %25 = dma.done [#allocation3], 256
    $region13: #{tpu_custom_call.1} parent=1 // pred_fallthru
      _
    %v26 = vld [vmem:[#allocation2] sm:$0xff]
    %v27 = vld [vmem:[#allocation2 + $0x8] sm:$0xff]
    %v28 = vld [vmem:[%s1] sm:$0xff]
    %30 = vset.pattern.permute.xlu0 0
    %31 = vperm.xlu0 %30, %v28
    %v32 = vpop.permute.xlu0 %31
    %v34 = vmul.f32 %v26, %v32
    %v35 = vmul.f32 %v27, %v32
    %36 = vst [vmem:[#allocation5] sm:$0xff] %v34
    %37 = vst [vmem:[#allocation5 + $0x8] sm:$0xff] %v35
    // Predicated region
    $region14: #{tpu_custom_call.1} parent=1 // pred_check
      _
    $region15: #{tpu_custom_call.1} parent=1 // pred_check_branch
      %39 = sbr.rel (0) target = $region17
    $region16: #{tpu_custom_call.1} parent=1 // pred_region
      %41 = vsyncadd [#allocation4], 0
      %s43 = sshll.u32 [#allocation5], 4
      %s44 = int_to_ptr.vmem [resolvable:$true] %s43
      %s45 = sshll.u32 %s2, 4
      %s46 = int_to_ptr.hbm [resolvable:$true] %s45
      %48 = dma.vmem_to_hbm [thread:$0]  %s44, 256, %s46, [#allocation4]
    $region17: #{tpu_custom_call.1} parent=1 // pred_fallthru
      _
    // Predicated region
    $region18: #{tpu_custom_call.1} parent=1 // pred_check
      _
    $region19: #{tpu_custom_call.1} parent=1 // pred_check_branch
      %50 = sbr.rel (0) target = $region21
    $region20: #{tpu_custom_call.1} parent=1 // pred_region
      %52 = dma.done [#allocation4], 256
    $region21: #{tpu_custom_call.1} parent=1 // pred_fallthru
      _
    %53 = vsyncpa [#allocation3], 1
    %54 = vsyncpa [#allocation4], 1

</llo_original>
